<compile_context>
chip_gen: v7x
topology: tpu7x:2x2x1
jax: 0.10.0
libtpu: 0.0.40
codegen_flags: <defaults>
</compile_context>

<pallas_src>
import jax
import jax.numpy as jnp
from jax.experimental import pallas as pl
from jax.experimental.pallas import tpu as pltpu


def _round_up(x, m):
    return (x + m - 1) // m * m


def _pick_tile(dim, target, align=128):
    """Largest multiple of `align` that divides `dim` and is <= max(target, align).

    `dim` must itself be a multiple of `align`.
    """
    target = max(target, align)
    best = align
    t = align
    lim = min(dim, target)
    while t <= lim:
        if dim % t == 0:
            best = t
        t += align
    return best


def _vmem_budget_bytes():
    """~80% of physical VMEM (128 MiB v5e/v6e -> ~102 MiB, 64 MiB v7x -> ~51 MiB)."""
    try:
        cap = int(pltpu.get_tpu_info().vmem_capacity_bytes)
    except Exception:
        cap = 64 * 1024 * 1024  # conservative fallback (v7x physical)
    return int(cap * 0.8)


def _linear_relu_kernel_acc(x_ref, w_ref, b_ref, o_ref, acc_ref):
    """(tm, tn) tile of relu(x @ w + b); K innermost; f32 scratch accumulator."""
    k = pl.program_id(2)
    partial = jnp.dot(x_ref[...].astype(jnp.bfloat16), w_ref[...],
                      preferred_element_type=jnp.float32)

    @pl.when(k == 0)
    def _():
        # Seed with bias + first partial: no zero-fill pass, no epilogue bias add.
        acc_ref[...] = partial + b_ref[...]

    @pl.when(k != 0)
    def _():
        acc_ref[...] += partial

    @pl.when(k == pl.num_programs(2) - 1)
    def _():
        o_ref[...] = jnp.maximum(acc_ref[...], 0.0).astype(o_ref.dtype)


def _linear_relu_kernel_f32out(x_ref, w_ref, b_ref, o_ref):
    """Same, but accumulates directly into the resident f32 output block."""
    k = pl.program_id(2)
    partial = jnp.dot(x_ref[...].astype(jnp.bfloat16), w_ref[...],
                      preferred_element_type=jnp.float32)

    @pl.when(k == 0)
    def _():
        o_ref[...] = partial + b_ref[...]

    @pl.when(k != 0)
    def _():
        o_ref[...] += partial

    @pl.when(k == pl.num_programs(2) - 1)
    def _():
        o_ref[...] = jnp.maximum(o_ref[...], 0.0)


def linear_relu_padded(x, w_t, b, *, out_dtype=jnp.float32,
                       tm_target=256, tn_target=2048, tk_target=3584):
    """relu(x @ w_t + b) with zero-padded operands.

    x   : (M, K)   activations (any float dtype; cast to bf16 inside the kernel).
    w_t : (Kp, Np) bf16 weights, Kp/Np multiples of 128, zero-padded past the
          logical (K, N); transpose of PyTorch's (out, in) Linear weight.
    b   : (1, Np)  f32 bias, zero-padded past the logical N.

    Returns the *padded* (Mp, Np) result.  Padded output columns are exactly 0
    (zero weight/bias padding); padded rows are garbage and must be sliced off
    by the caller.  Keeping the padding avoids slice + re-pad copies when
    chaining layers.
    """
    M, K = x.shape
    Kp, Np = w_t.shape
    assert Kp % 128 == 0 and Np % 128 == 0, "weights must be pre-padded to 128"
    assert K <= Kp, "activation inner dim exceeds padded weight inner dim"
    assert b.shape == (1, Np), "bias must be pre-shaped/padded to (1, Np)"
    assert w_t.dtype == jnp.bfloat16, "weights must be pre-cast to bfloat16"

    x_itemsize = jnp.dtype(x.dtype).itemsize
    out_itemsize = jnp.dtype(out_dtype).itemsize

    # --- tile selection: largest divisors of the padded dims, VMEM-bounded ---
    Mp0 = _round_up(M, 16)                      # bf16 packs 2 rows per sublane
    tm = min(_round_up(tm_target, 16), Mp0)
    tk = _pick_tile(Kp, tk_target)
    tn = _pick_tile(Np, tn_target)

    budget = _vmem_budget_bytes()
    headroom = 4 * 1024 * 1024                  # semaphores / compiler scratch

    def tiles_bytes(tm_, tk_, tn_):
        return (2 * tm_ * tk_ * x_itemsize                  # x tile, double buffered
                + 2 * tk_ * tn_ * 2                         # bf16 w tile, double buffered
                + 2 * tn_ * 4                               # bias tile, double buffered
                + 2 * tm_ * tn_ * out_itemsize              # out tile, double buffered
                + (tm_ * tn_ * 4 if out_dtype != jnp.float32 else 0))  # acc scratch

    while tiles_bytes(tm, tk, tn) + headroom > budget:
        if tk >= tn and tk > 128:
            tk = _pick_tile(Kp, tk - 128)
        elif tn > 128:
            tn = _pick_tile(Np, tn - 128)
        elif tm > 16:
            tm = max(16, _round_up(tm // 2, 16))
        else:
            break

    Mp = _round_up(Mp0, tm)

    # Zero-pad activations only if the padded shape actually differs (for the
    # real BoxHead shapes and for chained layers this is a no-op).
    if (Mp, Kp) != (M, K):
        x = jnp.zeros((Mp, Kp), x.dtype).at[:M, :K].set(x)

    grid = (Mp // tm, Np // tn, Kp // tk)

    if out_dtype == jnp.float32:
        kernel = _linear_relu_kernel_f32out
        scratch = []
    else:
        kernel = _linear_relu_kernel_acc
        scratch = [pltpu.VMEM((tm, tn), jnp.float32)]

    return pl.pallas_call(
        kernel,
        out_shape=jax.ShapeDtypeStruct((Mp, Np), out_dtype),
        grid_spec=pltpu.PrefetchScalarGridSpec(
            num_scalar_prefetch=0,
            grid=grid,
            in_specs=[
                pl.BlockSpec((tm, tk), lambda i, j, k: (i, k)),   # activations
                pl.BlockSpec((tk, tn), lambda i, j, k: (k, j)),   # weights (K, N)
                pl.BlockSpec((1, tn), lambda i, j, k: (0, j)),    # bias
            ],
            out_specs=pl.BlockSpec((tm, tn), lambda i, j, k: (i, j)),
            scratch_shapes=scratch,
        ),
        compiler_params=pltpu.CompilerParams(
            dimension_semantics=("parallel", "parallel", "arbitrary"),
            vmem_limit_bytes=budget,
        ),
    )(x, w_t, b)


class BoxHeadPallas:
    """Synthetic (deterministically initialized) VGG-style BoxHead.

    Weights are stored transposed (in, out), bfloat16, zero-padded to 128
    multiples ONCE at init, so no cast/pad copies run per forward call.
    """

    def __init__(self, in_features, hidden, key):
        k1, k2, k3, k4 = jax.random.split(key, 4)
        s1 = 1.0 / jnp.sqrt(in_features)
        s2 = 1.0 / jnp.sqrt(hidden)
        self.in_features = in_features
        self.hidden = hidden
        kp = _round_up(in_features, 128)
        hp = _round_up(hidden, 128)

        w1 = jax.random.uniform(k1, (in_features, hidden), jnp.float32, -s1, s1)
        b1 = jax.random.uniform(k2, (hidden,), jnp.float32, -s1, s1)
        w2 = jax.random.uniform(k3, (hidden, hidden), jnp.float32, -s2, s2)
        b2 = jax.random.uniform(k4, (hidden,), jnp.float32, -s2, s2)

        self.w1_t = (jnp.zeros((kp, hp), jnp.bfloat16)
                     .at[:in_features, :hidden].set(w1.astype(jnp.bfloat16)))
        self.b1 = jnp.zeros((1, hp), jnp.float32).at[0, :hidden].set(b1)
        self.w2_t = (jnp.zeros((hp, hp), jnp.bfloat16)
                     .at[:hidden, :hidden].set(w2.astype(jnp.bfloat16)))
        self.b2 = jnp.zeros((1, hp), jnp.float32).at[0, :hidden].set(b2)

    def __call__(self, x):
        n = x.shape[0]
        xf = x.reshape(n, -1)                       # torch.flatten(start_dim=1)
        # Layer 1: Linear + ReLU (+ Dropout = identity in eval).  bf16 hidden
        # halves the HBM round trip of the (M, 4096) intermediate; x is
        # streamed in its native dtype and cast to bf16 in-kernel (no separate
        # wrapper cast pass).
        h = linear_relu_padded(xf, self.w1_t, self.b1, out_dtype=jnp.bfloat16)
        # Layer 2: Linear + ReLU (+ Dropout = identity in eval); f32 output.
        out = linear_relu_padded(h, self.w2_t, self.b2, out_dtype=jnp.float32)
        # Single slice at the very end removes M/N padding carried through.
        return out[:n, :self.hidden]


if __name__ == "__main__":
    # Small shapes consistent with the module: pooled feature map (N, C, H, W);
    # flattened dim = C*H*W = 8*8*8 = 512; hidden = 256 (stand-in for the real
    # VGG classifier head's 25088 -> 4096 -> 4096).
    key = jax.random.PRNGKey(0)
    kx, kp = jax.random.split(key)
    x = jax.random.normal(kx, (2, 8, 8, 8), jnp.float32)

    head = BoxHeadPallas(in_features=8 * 8 * 8, hidden=256, key=kp)

    out = jax.block_until_ready(head(x))
    assert out.shape == (2, 256)
    assert out.dtype == jnp.float32

    # Pure-JAX reference mirroring the kernel's numerics (bf16 weights,
    # bf16-fed activations, f32 accumulation, bf16 hidden activation).
    xf = x.reshape(2, -1)
    w1 = head.w1_t[:head.in_features, :head.hidden].astype(jnp.float32)
    w2 = head.w2_t[:head.hidden, :head.hidden].astype(jnp.float32)
    b1 = head.b1[0, :head.hidden]
    b2 = head.b2[0, :head.hidden]
    h_ref = jnp.maximum(xf.astype(jnp.bfloat16).astype(jnp.float32) @ w1 + b1, 0.0)
    h_ref = h_ref.astype(jnp.bfloat16).astype(jnp.float32)
    ref = jnp.maximum(h_ref @ w2 + b2, 0.0)

    max_err = float(jnp.max(jnp.abs(out - ref)))
    assert jnp.allclose(out, ref, atol=2e-3, rtol=2e-3), max_err

    print("KERNEL_OK")
</pallas_src>

<mosaic_0001>
module attributes {stable_mosaic.version = 11 : i64} {
  func.func @_linear_relu_kernel_acc(%arg0: i32, %arg1: i32, %arg2: i32, %arg3: memref<16x512xf32, #tpu.memory_space<vmem>>, %arg4: memref<512x256xbf16, #tpu.memory_space<vmem>>, %arg5: memref<1x256xf32, #tpu.memory_space<vmem>>, %arg6: memref<16x256xbf16, #tpu.memory_space<vmem>>, %arg7: memref<16x256xf32, #tpu.memory_space<vmem>>) attributes {dimension_semantics = [#tpu.dimension_semantics<parallel>, #tpu.dimension_semantics<parallel>, #tpu.dimension_semantics<arbitrary>], iteration_bounds = array<i64: 1, 1, 1>, scalar_prefetch = 0 : i64, scratch_operands = 1 : i64, tpu.core_type = #tpu.core_type<tc>, window_params = [{transform_indices = @transform_0, window_bounds = array<i64: 16, 512>}, {transform_indices = @transform_1, window_bounds = array<i64: 512, 256>}, {transform_indices = @transform_2, window_bounds = array<i64: 1, 256>}, {transform_indices = @transform_3, window_bounds = array<i64: 16, 256>}]} {
    %c0 = arith.constant 0 : index
    %c0_0 = arith.constant 0 : index
    %0 = vector.load %arg3[%c0, %c0_0] : memref<16x512xf32, #tpu.memory_space<vmem>>, vector<16x512xf32>
    %1 = arith.truncf %0 : vector<16x512xf32> to vector<16x512xbf16>
    %c0_1 = arith.constant 0 : index
    %c0_2 = arith.constant 0 : index
    %2 = vector.load %arg4[%c0_1, %c0_2] : memref<512x256xbf16, #tpu.memory_space<vmem>>, vector<512x256xbf16>
    %cst = arith.constant dense<0.000000e+00> : vector<16x256xf32>
    %3 = tpu.matmul %1, %2, %cst {dimension_numbers = #tpu.dot_dimension_numbers<[1], [0], [0], [1], [0, 0, 1, 1], [], []>} : vector<16x512xbf16>, vector<512x256xbf16>, vector<16x256xf32> -> vector<16x256xf32>
    %c0_i32 = arith.constant 0 : i32
    %4 = arith.cmpi eq, %arg2, %c0_i32 : i32
    %5 = arith.extui %4 : i1 to i32
    %c0_i32_3 = arith.constant 0 : i32
    %6 = arith.cmpi ne, %5, %c0_i32_3 : i32
    scf.if %6 {
      %c0_8 = arith.constant 0 : index
      %c0_9 = arith.constant 0 : index
      %13 = vector.load %arg5[%c0_8, %c0_9] : memref<1x256xf32, #tpu.memory_space<vmem>>, vector<1x256xf32>
      %14 = vector.broadcast %13 : vector<1x256xf32> to vector<16x256xf32>
      %15 = arith.addf %3, %14 : vector<16x256xf32>
      %c0_10 = arith.constant 0 : index
      %c0_11 = arith.constant 0 : index
      %16 = vector.load %arg7[%c0_10, %c0_11] : memref<16x256xf32, #tpu.memory_space<vmem>>, vector<16x256xf32>
      tpu.vector_store %arg7[%c0_10, %c0_11], %15 {strides = array<i32>} : memref<16x256xf32, #tpu.memory_space<vmem>>, vector<16x256xf32>,
    } else {
    }
    %c0_i32_4 = arith.constant 0 : i32
    %7 = arith.cmpi ne, %arg2, %c0_i32_4 : i32
    %8 = arith.extui %7 : i1 to i32
    %c0_i32_5 = arith.constant 0 : i32
    %9 = arith.cmpi ne, %8, %c0_i32_5 : i32
    scf.if %9 {
      %c0_8 = arith.constant 0 : index
      %c0_9 = arith.constant 0 : index
      %13 = vector.load %arg7[%c0_8, %c0_9] : memref<16x256xf32, #tpu.memory_space<vmem>>, vector<16x256xf32>
      %14 = arith.addf %13, %3 : vector<16x256xf32>
      %c0_10 = arith.constant 0 : index
      %c0_11 = arith.constant 0 : index
      %15 = vector.load %arg7[%c0_10, %c0_11] : memref<16x256xf32, #tpu.memory_space<vmem>>, vector<16x256xf32>
      tpu.vector_store %arg7[%c0_10, %c0_11], %14 {strides = array<i32>} : memref<16x256xf32, #tpu.memory_space<vmem>>, vector<16x256xf32>,
    } else {
    }
    %c0_i32_6 = arith.constant 0 : i32
    %10 = arith.cmpi eq, %arg2, %c0_i32_6 : i32
    %11 = arith.extui %10 : i1 to i32
    %c0_i32_7 = arith.constant 0 : i32
    %12 = arith.cmpi ne, %11, %c0_i32_7 : i32
    scf.if %12 {
      %c0_8 = arith.constant 0 : index
      %c0_9 = arith.constant 0 : index
      %13 = vector.load %arg7[%c0_8, %c0_9] : memref<16x256xf32, #tpu.memory_space<vmem>>, vector<16x256xf32>
      %cst_10 = arith.constant 0.000000e+00 : f32
      %14 = vector.broadcast %cst_10 : f32 to vector<16x256xf32>
      %15 = arith.maximumf %13, %14 : vector<16x256xf32>
      %16 = arith.truncf %15 : vector<16x256xf32> to vector<16x256xbf16>
      %c0_11 = arith.constant 0 : index
      %c0_12 = arith.constant 0 : index
      %17 = vector.load %arg6[%c0_11, %c0_12] : memref<16x256xbf16, #tpu.memory_space<vmem>>, vector<16x256xbf16>
      tpu.vector_store %arg6[%c0_11, %c0_12], %16 {strides = array<i32>} : memref<16x256xbf16, #tpu.memory_space<vmem>>, vector<16x256xbf16>,
    } else {
    }
    return
  }
  func.func @transform_0(%arg0: i32, %arg1: i32, %arg2: i32) -> (i32, i32) {
    %c0_i32 = arith.constant 0 : i32
    return %arg0, %arg2 : i32, i32
  }
  func.func @transform_1(%arg0: i32, %arg1: i32, %arg2: i32) -> (i32, i32) {
    %c0_i32 = arith.constant 0 : i32
    return %arg2, %arg1 : i32, i32
  }
  func.func @transform_2(%arg0: i32, %arg1: i32, %arg2: i32) -> (i32, i32) {
    %c0_i32 = arith.constant 0 : i32
    %c0_i32_0 = arith.constant 0 : i32
    return %c0_i32, %arg1 : i32, i32
  }
  func.func @transform_3(%arg0: i32, %arg1: i32, %arg2: i32) -> (i32, i32) {
    %c0_i32 = arith.constant 0 : i32
    return %arg0, %arg1 : i32, i32
  }
}

</mosaic_0001>

<llo_original>
// kernel: tpu_custom_call.1
$region0: #{tpu_custom_call.1}
  #allocation0 [shape = 'u32[]', space=smem, size = 0x4, offset = 0x4, fixed_abs, tag = 'smem constant byte address 0x4 - core index']
  #allocation1 [shape = 'u32[144,128]{1,0:T(1,128)}', space=vmem, size = 0x12000, scoped, tag = 'internal scratch']
  #allocation2 [shape = 'f32[16,256]{1,0:T(8,128)}', space=vmem, size = 0x4000, scoped, tag = 'scratch operand']
  %s0 = inlined_call_operand.hbm [shape: f32[16,512], index: 0, kind: input, shape index: {}]
  %s1 = inlined_call_operand.hbm [shape: bf16[512,256], index: 1, kind: input, shape index: {}]
  %s2 = inlined_call_operand.vmem [shape: f32[1,256], index: 2, kind: input, shape index: {}]
  %s3 = inlined_call_operand.hbm [shape: bf16[16,256], index: 3, kind: output, shape index: {}]
  %s4 = sld [smem:[#allocation0]]
  $region42: #{tpu_custom_call.1} parent=0
    _
  %s6 = ssub.s32 1, %s4
  %s7 = scalar_select 0, %s6, %s4
  $region1: #{tpu_custom_call.1} parent=0
    #allocation3 [shape = 'u8[32768]{0}', space=vmem, size = 0x8000, scoped, tag = 'input window, operand 0, single buffered']
    #allocation4 [shape = 's32[1]{0}', space=sflag, size = 0x4, scoped, tag = 'scoped memory for tpu_custom_call.1']
    #allocation5 [shape = 's32[1]{0}', space=sflag, size = 0x4, scoped, tag = 'scoped memory for tpu_custom_call.1']
    #allocation6 [shape = 'u8[262144]{0}', space=vmem, size = 0x40000, scoped, tag = 'input window, operand 1, single buffered']
    #allocation7 [shape = 's32[1]{0}', space=sflag, size = 0x4, scoped, tag = 'scoped memory for tpu_custom_call.1']
    #allocation8 [shape = 'u8[8192]{0}', space=vmem, size = 0x2000, scoped, tag = 'output window, operand 0, single buffered']
    %8 = vsyncpa [#allocation4], 0
    %9 = vsyncpa [#allocation7], 0
    %10 = vsyncpa [#allocation5], 0
    // Predicated region
    $region2: #{tpu_custom_call.1} parent=1 // pred_check
      _
    $region3: #{tpu_custom_call.1} parent=1 // pred_check_branch
      %12 = sbr.rel (0) target = $region5
    $region4: #{tpu_custom_call.1} parent=1 // pred_region
      %s14 = ssub.s32 1024, 1024
      %15 = vsyncadd [#allocation4], %s14
      %s16 = sshll.u32 [#allocation3], 4
      %s17 = int_to_ptr.vmem [resolvable:$true] %s16
      %22 = dma.hbm_to_vmem [thread:$0]  %s0, 1024, %s17, [#allocation4], 512, 512, 32
    $region5: #{tpu_custom_call.1} parent=1 // pred_fallthru
      _
    // Predicated region
    $region6: #{tpu_custom_call.1} parent=1 // pred_check
      _
    $region7: #{tpu_custom_call.1} parent=1 // pred_check_branch
      %24 = sbr.rel (0) target = $region9
    $region8: #{tpu_custom_call.1} parent=1 // pred_region
      %s26 = ssub.s32 8192, 8192
      %27 = vsyncadd [#allocation7], %s26
      %s28 = sshll.u32 [#allocation6], 4
      %s29 = int_to_ptr.vmem [resolvable:$true] %s28
      %34 = dma.hbm_to_vmem [thread:$0]  %s1, 8192, %s29, [#allocation7], 128, 128, 8
    $region9: #{tpu_custom_call.1} parent=1 // pred_fallthru
      _
    // Predicated region
    $region10: #{tpu_custom_call.1} parent=1 // pred_check
      _
    $region11: #{tpu_custom_call.1} parent=1 // pred_check_branch
      %36 = sbr.rel (0) target = $region13
    $region12: #{tpu_custom_call.1} parent=1 // pred_region
      _
    $region13: #{tpu_custom_call.1} parent=1 // pred_fallthru
      _
    // Predicated region
    $region14: #{tpu_custom_call.1} parent=1 // pred_check
      _
    $region15: #{tpu_custom_call.1} parent=1 // pred_check_branch
      %38 = sbr.rel (0) target = $region17
    $region16: #{tpu_custom_call.1} parent=1 // pred_region
      %39 = dma.done [#allocation4], 1024
    $region17: #{tpu_custom_call.1} parent=1 // pred_fallthru
      _
    // Predicated region
    $region18: #{tpu_custom_call.1} parent=1 // pred_check
      _
    $region19: #{tpu_custom_call.1} parent=1 // pred_check_branch
      %41 = sbr.rel (0) target = $region21
    $region20: #{tpu_custom_call.1} parent=1 // pred_region
      %42 = dma.done [#allocation7], 8192
    $region21: #{tpu_custom_call.1} parent=1 // pred_fallthru
      _
    %v43 = vld [vmem:[#allocation3] sm:$0xff]
    %v44 = vld [vmem:[#allocation3 + $0x8] sm:$0xff]
    %v45 = vld [vmem:[#allocation3 + $0x10] sm:$0xff]
    %v46 = vld [vmem:[#allocation3 + $0x18] sm:$0xff]
    %v47 = vld [vmem:[#allocation3 + $0x20] sm:$0xff]
    %v48 = vld [vmem:[#allocation3 + $0x28] sm:$0xff]
    %v49 = vld [vmem:[#allocation3 + $0x30] sm:$0xff]
    %v50 = vld [vmem:[#allocation3 + $0x38] sm:$0xff]
    %v51 = vpack.c.bf16 %v47, %v43
    %v52 = vpack.c.bf16 %v48, %v44
    %v53 = vpack.c.bf16 %v49, %v45
    %v54 = vpack.c.bf16 %v50, %v46
    %v55 = vld [vmem:[#allocation6] sm:$0xff]
    %v56 = vld [vmem:[#allocation6 + $0x8] sm:$0xff]
    %v57 = vld [vmem:[#allocation6 + $0x10] sm:$0xff]
    %v58 = vld [vmem:[#allocation6 + $0x18] sm:$0xff]
    %v59 = vld [vmem:[#allocation6 + $0x20] sm:$0xff]
    %v60 = vld [vmem:[#allocation6 + $0x28] sm:$0xff]
    %v61 = vld [vmem:[#allocation6 + $0x30] sm:$0xff]
    %v62 = vld [vmem:[#allocation6 + $0x38] sm:$0xff]
    %v63 = vld [vmem:[#allocation6 + $0x40] sm:$0xff]
    %v64 = vld [vmem:[#allocation6 + $0x48] sm:$0xff]
    %v65 = vld [vmem:[#allocation6 + $0x50] sm:$0xff]
    %v66 = vld [vmem:[#allocation6 + $0x58] sm:$0xff]
    %v67 = vld [vmem:[#allocation6 + $0x60] sm:$0xff]
    %v68 = vld [vmem:[#allocation6 + $0x68] sm:$0xff]
    %v69 = vld [vmem:[#allocation6 + $0x70] sm:$0xff]
    %v70 = vld [vmem:[#allocation6 + $0x78] sm:$0xff]
    %v71 = vld [vmem:[#allocation6 + $0x80] sm:$0xff]
    %v72 = vld [vmem:[#allocation6 + $0x88] sm:$0xff]
    %v73 = vld [vmem:[#allocation6 + $0x90] sm:$0xff]
    %v74 = vld [vmem:[#allocation6 + $0x98] sm:$0xff]
    %v75 = vld [vmem:[#allocation6 + $0xa0] sm:$0xff]
    %v76 = vld [vmem:[#allocation6 + $0xa8] sm:$0xff]
    %v77 = vld [vmem:[#allocation6 + $0xb0] sm:$0xff]
    %v78 = vld [vmem:[#allocation6 + $0xb8] sm:$0xff]
    %v79 = vld [vmem:[#allocation6 + $0xc0] sm:$0xff]
    %v80 = vld [vmem:[#allocation6 + $0xc8] sm:$0xff]
    %v81 = vld [vmem:[#allocation6 + $0xd0] sm:$0xff]
    %v82 = vld [vmem:[#allocation6 + $0xd8] sm:$0xff]
    %v83 = vld [vmem:[#allocation6 + $0xe0] sm:$0xff]
    %v84 = vld [vmem:[#allocation6 + $0xe8] sm:$0xff]
    %v85 = vld [vmem:[#allocation6 + $0xf0] sm:$0xff]
    %v86 = vld [vmem:[#allocation6 + $0xf8] sm:$0xff]
    %v87 = vld [vmem:[#allocation6 + $0x100] sm:$0xff]
    %v88 = vld [vmem:[#allocation6 + $0x108] sm:$0xff]
    %v89 = vld [vmem:[#allocation6 + $0x110] sm:$0xff]
    %v90 = vld [vmem:[#allocation6 + $0x118] sm:$0xff]
    %v91 = vld [vmem:[#allocation6 + $0x120] sm:$0xff]
    %v92 = vld [vmem:[#allocation6 + $0x128] sm:$0xff]
    %v93 = vld [vmem:[#allocation6 + $0x130] sm:$0xff]
    %v94 = vld [vmem:[#allocation6 + $0x138] sm:$0xff]
    %v95 = vld [vmem:[#allocation6 + $0x140] sm:$0xff]
    %v96 = vld [vmem:[#allocation6 + $0x148] sm:$0xff]
    %v97 = vld [vmem:[#allocation6 + $0x150] sm:$0xff]
    %v98 = vld [vmem:[#allocation6 + $0x158] sm:$0xff]
    %v99 = vld [vmem:[#allocation6 + $0x160] sm:$0xff]
    %v100 = vld [vmem:[#allocation6 + $0x168] sm:$0xff]
    %v101 = vld [vmem:[#allocation6 + $0x170] sm:$0xff]
    %v102 = vld [vmem:[#allocation6 + $0x178] sm:$0xff]
    %v103 = vld [vmem:[#allocation6 + $0x180] sm:$0xff]
    %v104 = vld [vmem:[#allocation6 + $0x188] sm:$0xff]
    %v105 = vld [vmem:[#allocation6 + $0x190] sm:$0xff]
    %v106 = vld [vmem:[#allocation6 + $0x198] sm:$0xff]
    %v107 = vld [vmem:[#allocation6 + $0x1a0] sm:$0xff]
    %v108 = vld [vmem:[#allocation6 + $0x1a8] sm:$0xff]
    %v109 = vld [vmem:[#allocation6 + $0x1b0] sm:$0xff]
    %v110 = vld [vmem:[#allocation6 + $0x1b8] sm:$0xff]
    %v111 = vld [vmem:[#allocation6 + $0x1c0] sm:$0xff]
    %v112 = vld [vmem:[#allocation6 + $0x1c8] sm:$0xff]
    %v113 = vld [vmem:[#allocation6 + $0x1d0] sm:$0xff]
    %v114 = vld [vmem:[#allocation6 + $0x1d8] sm:$0xff]
    %v115 = vld [vmem:[#allocation6 + $0x1e0] sm:$0xff]
    %v116 = vld [vmem:[#allocation6 + $0x1e8] sm:$0xff]
    %v117 = vld [vmem:[#allocation6 + $0x1f0] sm:$0xff]
    %v118 = vld [vmem:[#allocation6 + $0x1f8] sm:$0xff]
    %v183 = vunpack.c.l.b16 %v55
    %v184 = vunpack.c.h.b16 %v55
    %v185 = vunpack.c.l.b16 %v56
    %v186 = vunpack.c.h.b16 %v56
    %v187 = vunpack.c.l.b16 %v57
    %v188 = vunpack.c.h.b16 %v57
    %v189 = vunpack.c.l.b16 %v58
    %v190 = vunpack.c.h.b16 %v58
    %v191 = vunpack.c.l.b16 %v59
    %v192 = vunpack.c.h.b16 %v59
    %v193 = vunpack.c.l.b16 %v60
    %v194 = vunpack.c.h.b16 %v60
    %v195 = vunpack.c.l.b16 %v61
    %v196 = vunpack.c.h.b16 %v61
    %v197 = vunpack.c.l.b16 %v62
    %v198 = vunpack.c.h.b16 %v62
    %v199 = vunpack.c.l.b16 %v63
    %v200 = vunpack.c.h.b16 %v63
    %v201 = vunpack.c.l.b16 %v64
    %v202 = vunpack.c.h.b16 %v64
    %v203 = vunpack.c.l.b16 %v65
    %v204 = vunpack.c.h.b16 %v65
    %v205 = vunpack.c.l.b16 %v66
    %v206 = vunpack.c.h.b16 %v66
    %v207 = vunpack.c.l.b16 %v67
    %v208 = vunpack.c.h.b16 %v67
    %v209 = vunpack.c.l.b16 %v68
    %v210 = vunpack.c.h.b16 %v68
    %v211 = vunpack.c.l.b16 %v69
    %v212 = vunpack.c.h.b16 %v69
    %v213 = vunpack.c.l.b16 %v70
    %v214 = vunpack.c.h.b16 %v70
    %v215 = vunpack.c.l.b16 %v71
    %v216 = vunpack.c.h.b16 %v71
    %v217 = vunpack.c.l.b16 %v72
    %v218 = vunpack.c.h.b16 %v72
    %v219 = vunpack.c.l.b16 %v73
    %v220 = vunpack.c.h.b16 %v73
    %v221 = vunpack.c.l.b16 %v74
    %v222 = vunpack.c.h.b16 %v74
    %v223 = vunpack.c.l.b16 %v75
    %v224 = vunpack.c.h.b16 %v75
    %v225 = vunpack.c.l.b16 %v76
    %v226 = vunpack.c.h.b16 %v76
    %v227 = vunpack.c.l.b16 %v77
    %v228 = vunpack.c.h.b16 %v77
    %v229 = vunpack.c.l.b16 %v78
    %v230 = vunpack.c.h.b16 %v78
    %v231 = vunpack.c.l.b16 %v79
    %v232 = vunpack.c.h.b16 %v79
    %v233 = vunpack.c.l.b16 %v80
    %v234 = vunpack.c.h.b16 %v80
    %v235 = vunpack.c.l.b16 %v81
    %v236 = vunpack.c.h.b16 %v81
    %v237 = vunpack.c.l.b16 %v82
    %v238 = vunpack.c.h.b16 %v82
    %v239 = vunpack.c.l.b16 %v83
    %v240 = vunpack.c.h.b16 %v83
    %v241 = vunpack.c.l.b16 %v84
    %v242 = vunpack.c.h.b16 %v84
    %v243 = vunpack.c.l.b16 %v85
    %v244 = vunpack.c.h.b16 %v85
    %v245 = vunpack.c.l.b16 %v86
    %v246 = vunpack.c.h.b16 %v86
    %v247 = vunpack.c.l.b16 %v87
    %v248 = vunpack.c.h.b16 %v87
    %v249 = vunpack.c.l.b16 %v88
    %v250 = vunpack.c.h.b16 %v88
    %v251 = vunpack.c.l.b16 %v89
    %v252 = vunpack.c.h.b16 %v89
    %v253 = vunpack.c.l.b16 %v90
    %v254 = vunpack.c.h.b16 %v90
    %v255 = vunpack.c.l.b16 %v91
    %v256 = vunpack.c.h.b16 %v91
    %v257 = vunpack.c.l.b16 %v92
    %v258 = vunpack.c.h.b16 %v92
    %v259 = vunpack.c.l.b16 %v93
    %v260 = vunpack.c.h.b16 %v93
    %v261 = vunpack.c.l.b16 %v94
    %v262 = vunpack.c.h.b16 %v94
    %v263 = vunpack.c.l.b16 %v95
    %v264 = vunpack.c.h.b16 %v95
    %v265 = vunpack.c.l.b16 %v96
    %v266 = vunpack.c.h.b16 %v96
    %v267 = vunpack.c.l.b16 %v97
    %v268 = vunpack.c.h.b16 %v97
    %v269 = vunpack.c.l.b16 %v98
    %v270 = vunpack.c.h.b16 %v98
    %v271 = vunpack.c.l.b16 %v99
    %v272 = vunpack.c.h.b16 %v99
    %v273 = vunpack.c.l.b16 %v100
    %v274 = vunpack.c.h.b16 %v100
    %v275 = vunpack.c.l.b16 %v101
    %v276 = vunpack.c.h.b16 %v101
    %v277 = vunpack.c.l.b16 %v102
    %v278 = vunpack.c.h.b16 %v102
    %v279 = vunpack.c.l.b16 %v103
    %v280 = vunpack.c.h.b16 %v103
    %v281 = vunpack.c.l.b16 %v104
    %v282 = vunpack.c.h.b16 %v104
    %v283 = vunpack.c.l.b16 %v105
    %v284 = vunpack.c.h.b16 %v105
    %v285 = vunpack.c.l.b16 %v106
    %v286 = vunpack.c.h.b16 %v106
    %v287 = vunpack.c.l.b16 %v107
    %v288 = vunpack.c.h.b16 %v107
    %v289 = vunpack.c.l.b16 %v108
    %v290 = vunpack.c.h.b16 %v108
    %v291 = vunpack.c.l.b16 %v109
    %v292 = vunpack.c.h.b16 %v109
    %v293 = vunpack.c.l.b16 %v110
    %v294 = vunpack.c.h.b16 %v110
    %v295 = vunpack.c.l.b16 %v111
    %v296 = vunpack.c.h.b16 %v111
    %v297 = vunpack.c.l.b16 %v112
    %v298 = vunpack.c.h.b16 %v112
    %v299 = vunpack.c.l.b16 %v113
    %v300 = vunpack.c.h.b16 %v113
    %v301 = vunpack.c.l.b16 %v114
    %v302 = vunpack.c.h.b16 %v114
    %v303 = vunpack.c.l.b16 %v115
    %v304 = vunpack.c.h.b16 %v115
    %v305 = vunpack.c.l.b16 %v116
    %v306 = vunpack.c.h.b16 %v116
    %v307 = vunpack.c.l.b16 %v117
    %v308 = vunpack.c.h.b16 %v117
    %v309 = vunpack.c.l.b16 %v118
    %v310 = vunpack.c.h.b16 %v118
    %v311 = vpack.c.b16 %v185, %v183
    %v312 = vpack.c.b16 %v186, %v184
    %v313 = vpack.c.b16 %v189, %v187
    %v314 = vpack.c.b16 %v190, %v188
    %v315 = vpack.c.b16 %v193, %v191
    %v316 = vpack.c.b16 %v194, %v192
    %v317 = vpack.c.b16 %v197, %v195
    %v318 = vpack.c.b16 %v198, %v196
    %v319 = vpack.c.b16 %v201, %v199
    %v320 = vpack.c.b16 %v202, %v200
    %v321 = vpack.c.b16 %v205, %v203
    %v322 = vpack.c.b16 %v206, %v204
    %v323 = vpack.c.b16 %v209, %v207
    %v324 = vpack.c.b16 %v210, %v208
    %v325 = vpack.c.b16 %v213, %v211
    %v326 = vpack.c.b16 %v214, %v212
    %v327 = vpack.c.b16 %v217, %v215
    %v328 = vpack.c.b16 %v218, %v216
    %v329 = vpack.c.b16 %v221, %v219
    %v330 = vpack.c.b16 %v222, %v220
    %v331 = vpack.c.b16 %v225, %v223
    %v332 = vpack.c.b16 %v226, %v224
    %v333 = vpack.c.b16 %v229, %v227
    %v334 = vpack.c.b16 %v230, %v228
    %v335 = vpack.c.b16 %v233, %v231
    %v336 = vpack.c.b16 %v234, %v232
    %v337 = vpack.c.b16 %v237, %v235
    %v338 = vpack.c.b16 %v238, %v236
    %v339 = vpack.c.b16 %v241, %v239
    %v340 = vpack.c.b16 %v242, %v240
    %v341 = vpack.c.b16 %v245, %v243
    %v342 = vpack.c.b16 %v246, %v244
    %v343 = vpack.c.b16 %v249, %v247
    %v344 = vpack.c.b16 %v250, %v248
    %v345 = vpack.c.b16 %v253, %v251
    %v346 = vpack.c.b16 %v254, %v252
    %v347 = vpack.c.b16 %v257, %v255
    %v348 = vpack.c.b16 %v258, %v256
    %v349 = vpack.c.b16 %v261, %v259
    %v350 = vpack.c.b16 %v262, %v260
    %v351 = vpack.c.b16 %v265, %v263
    %v352 = vpack.c.b16 %v266, %v264
    %v353 = vpack.c.b16 %v269, %v267
    %v354 = vpack.c.b16 %v270, %v268
    %v355 = vpack.c.b16 %v273, %v271
    %v356 = vpack.c.b16 %v274, %v272
    %v357 = vpack.c.b16 %v277, %v275
    %v358 = vpack.c.b16 %v278, %v276
    %v359 = vpack.c.b16 %v281, %v279
    %v360 = vpack.c.b16 %v282, %v280
    %v361 = vpack.c.b16 %v285, %v283
    %v362 = vpack.c.b16 %v286, %v284
    %v363 = vpack.c.b16 %v289, %v287
    %v364 = vpack.c.b16 %v290, %v288
    %v365 = vpack.c.b16 %v293, %v291
    %v366 = vpack.c.b16 %v294, %v292
    %v367 = vpack.c.b16 %v297, %v295
    %v368 = vpack.c.b16 %v298, %v296
    %v369 = vpack.c.b16 %v301, %v299
    %v370 = vpack.c.b16 %v302, %v300
    %v371 = vpack.c.b16 %v305, %v303
    %v372 = vpack.c.b16 %v306, %v304
    %v373 = vpack.c.b16 %v309, %v307
    %v374 = vpack.c.b16 %v310, %v308
    %439 = vmatprep.subr.bf16.mxu0 %v312
    %440 = vmatpush1.bf16.msra.mxu0 %v311
    %441 = vmatprep.subr.bf16.mxu0 %v314
    %442 = vmatpush1.bf16.msra.mxu0 %v313
    %443 = vmatprep.subr.bf16.mxu0 %v316
    %444 = vmatpush1.bf16.msra.mxu0 %v315
    %445 = vmatprep.subr.bf16.mxu0 %v318
    %446 = vmatpush1.bf16.msra.mxu0 %v317
    %447 = vmatprep.subr.bf16.mxu0 %v320
    %448 = vmatpush1.bf16.msra.mxu0 %v319
    %449 = vmatprep.subr.bf16.mxu0 %v322
    %450 = vmatpush1.bf16.msra.mxu0 %v321
    %451 = vmatprep.subr.bf16.mxu0 %v324
    %452 = vmatpush1.bf16.msra.mxu0 %v323
    %453 = vmatprep.subr.bf16.mxu0 %v326
    %454 = vmatpush1.bf16.msra.mxu0 %v325
    %455 = vmatprep.subr.bf16.mxu0 %v328
    %456 = vmatpush1.bf16.msra.mxu0 %v327
    %457 = vmatprep.subr.bf16.mxu0 %v330
    %458 = vmatpush1.bf16.msra.mxu0 %v329
    %459 = vmatprep.subr.bf16.mxu0 %v332
    %460 = vmatpush1.bf16.msra.mxu0 %v331
    %461 = vmatprep.subr.bf16.mxu0 %v334
    %462 = vmatpush1.bf16.msra.mxu0 %v333
    %463 = vmatprep.subr.bf16.mxu0 %v336
    %464 = vmatpush1.bf16.msra.mxu0 %v335
    %465 = vmatprep.subr.bf16.mxu0 %v338
    %466 = vmatpush1.bf16.msra.mxu0 %v337
    %467 = vmatprep.subr.bf16.mxu0 %v340
    %468 = vmatpush1.bf16.msra.mxu0 %v339
    %469 = vmatprep.subr.bf16.mxu0 %v342
    %470 = vmatpush1.bf16.msra.mxu0 %v341
    %471 = vmatprep.mubr.bf16.mxu0 %v52
    %472 = vmatmul.mubr.bf16.gmra.mrb[0].mxu0 %v51
    %v473 = vpop.f32.mrb[0].mxu0
    %v474 = vadd.f32 0.0, %v473
    %v475 = vpop.f32.mrb[0].mxu0
    %v476 = vadd.f32 0.0, %v475
    %v477 = vpop.f32.mrb[0].mxu0
    %v478 = vadd.f32 0.0, %v477
    %v479 = vpop.f32.mrb[0].mxu0
    %v480 = vadd.f32 0.0, %v479
    %481 = vdwg.mxu0
    %482 = vmatprep.subr.bf16.mxu0 %v344
    %483 = vmatpush1.bf16.msra.mxu0 %v343
    %484 = vmatprep.subr.bf16.mxu0 %v346
    %485 = vmatpush1.bf16.msra.mxu0 %v345
    %486 = vmatprep.subr.bf16.mxu0 %v348
    %487 = vmatpush1.bf16.msra.mxu0 %v347
    %488 = vmatprep.subr.bf16.mxu0 %v350
    %489 = vmatpush1.bf16.msra.mxu0 %v349
    %490 = vmatprep.subr.bf16.mxu0 %v352
    %491 = vmatpush1.bf16.msra.mxu0 %v351
    %492 = vmatprep.subr.bf16.mxu0 %v354
    %493 = vmatpush1.bf16.msra.mxu0 %v353
    %494 = vmatprep.subr.bf16.mxu0 %v356
    %495 = vmatpush1.bf16.msra.mxu0 %v355
    %496 = vmatprep.subr.bf16.mxu0 %v358
    %497 = vmatpush1.bf16.msra.mxu0 %v357
    %498 = vmatprep.subr.bf16.mxu0 %v360
    %499 = vmatpush1.bf16.msra.mxu0 %v359
    %500 = vmatprep.subr.bf16.mxu0 %v362
    %501 = vmatpush1.bf16.msra.mxu0 %v361
    %502 = vmatprep.subr.bf16.mxu0 %v364
    %503 = vmatpush1.bf16.msra.mxu0 %v363
    %504 = vmatprep.subr.bf16.mxu0 %v366
    %505 = vmatpush1.bf16.msra.mxu0 %v365
    %506 = vmatprep.subr.bf16.mxu0 %v368
    %507 = vmatpush1.bf16.msra.mxu0 %v367
    %508 = vmatprep.subr.bf16.mxu0 %v370
    %509 = vmatpush1.bf16.msra.mxu0 %v369
    %510 = vmatprep.subr.bf16.mxu0 %v372
    %511 = vmatpush1.bf16.msra.mxu0 %v371
    %512 = vmatprep.subr.bf16.mxu0 %v374
    %513 = vmatpush1.bf16.msra.mxu0 %v373
    %514 = vmatprep.mubr.bf16.mxu0 %v54
    %515 = vmatmul.mubr.bf16.gmra.mrb[0].mxu0 %v53
    %v516 = vpop.f32.mrb[0].mxu0
    %v517 = vadd.f32 %v474, %v516
    %v518 = vpop.f32.mrb[0].mxu0
    %v519 = vadd.f32 %v476, %v518
    %v520 = vpop.f32.mrb[0].mxu0
    %v521 = vadd.f32 %v478, %v520
    %v522 = vpop.f32.mrb[0].mxu0
    %v523 = vadd.f32 %v480, %v522
    %524 = vdwg.mxu0
    %p525 = scmp.eq.s32.totalorder 0, 0
    // Predicated region
    $region22: #{tpu_custom_call.1} parent=1 // pred_check
      %p526 = pneg %p525
    $region23: #{tpu_custom_call.1} parent=1 // pred_check_branch
      %528 = sbr.rel (%p526) target = $region25
    $region24: #{tpu_custom_call.1} parent=1 // pred_region
      %v529 = vld [vmem:[%s2] sm:$0x3]
      %v531 = vlaneseq
      %v532 = vshrl.u32 %v531, 7
      %v533 = vsub.s32 0, %v532
      %v534 = vrot.slane %v529, %v533
      %v535 = vlaneseq
      %v536 = vshrl.u32 %v535, 7
      %v537 = vsub.s32 1, %v536
      %v538 = vrot.slane %v529, %v537
      %v541 = vadd.f32 %v517, %v534
      %v542 = vadd.f32 %v519, %v538
      %v543 = vadd.f32 %v521, %v534
      %v544 = vadd.f32 %v523, %v538
      %545 = vst [vmem:[#allocation2] sm:$0xff] %v541
      %546 = vst [vmem:[#allocation2 + $0x8] sm:$0xff] %v542
      %547 = vst [vmem:[#allocation2 + $0x10] sm:$0xff] %v543
      %548 = vst [vmem:[#allocation2 + $0x18] sm:$0xff] %v544
    $region25: #{tpu_custom_call.1} parent=1 // pred_fallthru
      _
    %p549 = scmp.ne.s32.totalorder 0, 0
    // Predicated region
    $region26: #{tpu_custom_call.1} parent=1 // pred_check
      %p550 = pneg %p549
    $region27: #{tpu_custom_call.1} parent=1 // pred_check_branch
      %552 = sbr.rel (%p550) target = $region29
    $region28: #{tpu_custom_call.1} parent=1 // pred_region
      %v553 = vld [vmem:[#allocation2] sm:$0xff]
      %v554 = vld [vmem:[#allocation2 + $0x8] sm:$0xff]
      %v555 = vld [vmem:[#allocation2 + $0x10] sm:$0xff]
      %v556 = vld [vmem:[#allocation2 + $0x18] sm:$0xff]
      %v557 = vadd.f32 %v553, %v517
      %v558 = vadd.f32 %v554, %v519
      %v559 = vadd.f32 %v555, %v521
      %v560 = vadd.f32 %v556, %v523
      %561 = vst [vmem:[#allocation2] sm:$0xff] %v557
      %562 = vst [vmem:[#allocation2 + $0x8] sm:$0xff] %v558
      %563 = vst [vmem:[#allocation2 + $0x10] sm:$0xff] %v559
      %564 = vst [vmem:[#allocation2 + $0x18] sm:$0xff] %v560
    $region29: #{tpu_custom_call.1} parent=1 // pred_fallthru
      _
    // Predicated region
    $region30: #{tpu_custom_call.1} parent=1 // pred_check
      %p565 = pneg %p525
    $region31: #{tpu_custom_call.1} parent=1 // pred_check_branch
      %567 = sbr.rel (%p565) target = $region33
    $region32: #{tpu_custom_call.1} parent=1 // pred_region
      %v568 = vld [vmem:[#allocation2] sm:$0xff]
      %v569 = vld [vmem:[#allocation2 + $0x8] sm:$0xff]
      %v570 = vld [vmem:[#allocation2 + $0x10] sm:$0xff]
      %v571 = vld [vmem:[#allocation2 + $0x18] sm:$0xff]
      %v572 = vmax.f32 %v568, 0.0
      %v573 = vmax.f32 %v569, 0.0
      %v574 = vmax.f32 %v570, 0.0
      %v575 = vmax.f32 %v571, 0.0
      %v576 = vpack.c.bf16 %v574, %v572
      %v577 = vpack.c.bf16 %v575, %v573
      %v580 = vunpack.c.l.b16 %v576
      %v581 = vunpack.c.l.b16 %v577
      %v582 = vunpack.c.h.b16 %v576
      %v583 = vunpack.c.h.b16 %v577
      %v584 = vpack.c.b16 %v581, %v580
      %v585 = vpack.c.b16 %v583, %v582
      %588 = vst [vmem:[#allocation8] sm:$0xff] %v584
      %589 = vst [vmem:[#allocation8 + $0x8] sm:$0xff] %v585
    $region33: #{tpu_custom_call.1} parent=1 // pred_fallthru
      _
    // Predicated region
    $region34: #{tpu_custom_call.1} parent=1 // pred_check
      _
    $region35: #{tpu_custom_call.1} parent=1 // pred_check_branch
      %591 = sbr.rel (0) target = $region37
    $region36: #{tpu_custom_call.1} parent=1 // pred_region
      %s593 = ssub.s32 256, 256
      %594 = vsyncadd [#allocation5], %s593
      %s595 = sshll.u32 [#allocation8], 4
      %s596 = int_to_ptr.vmem [resolvable:$true] %s595
      %601 = dma.vmem_to_hbm [thread:$0]  %s596, 256, %s3, [#allocation5], 128, 128, 8
    $region37: #{tpu_custom_call.1} parent=1 // pred_fallthru
      _
    // Predicated region
    $region38: #{tpu_custom_call.1} parent=1 // pred_check
      _
    $region39: #{tpu_custom_call.1} parent=1 // pred_check_branch
      %603 = sbr.rel (0) target = $region41
    $region40: #{tpu_custom_call.1} parent=1 // pred_region
      %604 = dma.done [#allocation5], 256
    $region41: #{tpu_custom_call.1} parent=1 // pred_fallthru
      _
    %605 = vsyncpa [#allocation4], 1
    %606 = vsyncpa [#allocation7], 1
    %607 = vsyncpa [#allocation5], 1

</llo_original>
